<compile_context>
chip_gen: v7x
topology: tpu7x:2x2x1
jax: 0.10.0
libtpu: 0.0.40
codegen_flags: <defaults>
</compile_context>

<pallas_src>
import functools
import math

import jax
import jax.numpy as jnp
import numpy as np
from jax.experimental import pallas as pl
from jax.experimental.pallas import tpu as pltpu

EPS = 1e-5
_VMEM = pl.BlockSpec(memory_space=pltpu.MemorySpace.VMEM)

# Geometry of the 9 depthwise layers, in packing order:
#   modulation[0..2] : 11x11, 9x9, 7x7      ("same" padding, groups=dim)
#   conv2[1] chain   : 3x3, 3x1, 1x3
#   conv2[2] chain   : 5x5, 5x1, 1x5
_DW_LAYERS = ((11, 11), (9, 9), (7, 7), (3, 3), (3, 1), (1, 3), (5, 5), (5, 1), (1, 5))
_TAP_OFFSETS = []
_t = 0
for _kh, _kw in _DW_LAYERS:
    _TAP_OFFSETS.append(_t)
    _t += _kh * _kw
_TAP_OFFSETS = tuple(_TAP_OFFSETS)
_NUM_TAPS = _t                      # 301
_MAX_OFF = 5                        # largest spatial offset used by any tap
_MASK_ROWS = (2 * _MAX_OFF + 1) ** 2  # 121


def _cp_cols(layer):
    """(bias, gamma, beta) column indices of depthwise layer `layer` in the packed table."""
    base = 4 + 3 * layer
    return base, base + 1, base + 2


def _mask_row_idx(oy, ox):
    return (oy + _MAX_OFF) * (2 * _MAX_OFF + 1) + (ox + _MAX_OFF)


@functools.lru_cache(maxsize=None)
def _mask_table(B, H, W):
    """(121, B*H*W) float32: 1.0 where the (oy, ox)-shifted tap stays inside the image."""
    idx = np.arange(H * W)
    h, w = idx // W, idx % W
    rows = []
    for oy in range(-_MAX_OFF, _MAX_OFF + 1):
        for ox in range(-_MAX_OFF, _MAX_OFF + 1):
            ok = (h + oy >= 0) & (h + oy < H) & (w + ox >= 0) & (w + ox < W)
            rows.append(np.tile(ok.astype(np.float32), B))
    table = np.stack(rows)
    assert table.shape == (_MASK_ROWS, B * H * W)
    return jnp.asarray(table)


# ----------------------------------------------------------------------------
# Fused kernel
# ----------------------------------------------------------------------------
def _fused_kernel(B, C, H, W, roll_sign, x_ref, pw_ref, dww_ref, cp_ref, mask_ref, o_ref):
    """Entire Multi_Modulation forward on one VMEM-resident block.

    x_ref   : (B, C, M)    input, M = H*W (lane axis)
    pw_ref  : (2, C, C)    1x1 conv weights: [0]=self.w, [1]=conv2[0]   (Cout, Cin)
    dww_ref : (C, 301)     all depthwise taps; column = layer_offset + dh*kw + dw
    cp_ref  : (C, 31)      per-channel params: col0 w.bias, col1/2 bn1 g/b, col3 conv2[0].bias,
                           then (bias, gamma, beta) per depthwise layer
    mask_ref: (121, B*M)   border-validity masks per (oy, ox) offset
    o_ref   : (B, C, M)    output

    Internal layout is channel-major (C, N), N = B*M, so the 1x1 convs are single
    MXU matmuls, BN reduces along lanes only and per-channel params broadcast from (C,1).
    """
    M = H * W
    N = B * M
    f32 = jnp.float32
    inv_n = 1.0 / float(N)

    # Hoist the small parameter tables into values once; slice values thereafter.
    dww = dww_ref[...]              # (C, 301)
    cp = cp_ref[...]                # (C, 31)

    def col_w(j):                   # (C, 1) depthwise tap weight column
        return dww[:, j:j + 1]

    def col_cp(j):                  # (C, 1) per-channel parameter column
        return cp[:, j:j + 1]

    def mask(oy, ox):               # (1, N) float validity mask, reloaded per use
        r = _mask_row_idx(oy, ox)
        return mask_ref[r:r + 1, :]

    def advance(v, s):
        # out[c, p] = v[c, p + s]  (cyclic over the flattened B*H*W axis; every wrapped
        # or cross-image entry is zeroed by the border mask of the caller).
        if s % N == 0:
            return v
        return pltpu.roll(v, (roll_sign * -s) % N, axis=1)

    def shifted(v, oy, ox):
        if oy == 0 and ox == 0:
            return v                # interior tap: no roll, no mask
        return advance(v, oy * W + ox) * mask(oy, ox)

    def bn(y, g_col, b_col):
        # Training-mode BN (batch stats, biased var, eps=1e-5), single pass:
        # the two reductions are independent; affine folded into scale/shift.
        s1 = jnp.sum(y, axis=1, keepdims=True)
        s2 = jnp.sum(y * y, axis=1, keepdims=True)
        mean = s1 * inv_n
        var = s2 * inv_n - mean * mean
        scale = col_cp(g_col) * jax.lax.rsqrt(var + EPS)
        shift = col_cp(b_col) - mean * scale
        return y * scale + shift

    def dw_bn(inp, layer):
        # Depthwise conv + BN.  Conv bias omitted: a per-channel bias is exactly
        # cancelled by the mean subtraction of the following training-mode BN.
        kh, kw = _DW_LAYERS[layer]
        ph, pw_ = (kh - 1) // 2, (kw - 1) // 2
        off = _TAP_OFFSETS[layer]
        acc = inp * col_w(off + ph * kw + pw_)          # center tap first (no zero-init)
        for dy in range(kh):
            for dx in range(kw):
                if dy == ph and dx == pw_:
                    continue
                acc = acc + shifted(inp, dy - ph, dx - pw_) * col_w(off + dy * kw + dx)
        _bias, g_c, b_c = _cp_cols(layer)
        return bn(acc, g_c, b_c)

    # Input to channel-major (C, N): concatenate the B images along the lane axis.
    x = jnp.concatenate([x_ref[b] for b in range(B)], axis=1)      # (C, N)

    # fea = bn1(self.w(x))  -- self.w's bias cancels under the training-mode BN.
    fea = bn(jnp.dot(pw_ref[0], x, preferred_element_type=f32), 1, 2)

    # modulation[0..2](fea): the three branches share every shifted+masked view of fea.
    acc0 = fea * col_w(_TAP_OFFSETS[0] + 5 * 11 + 5)
    acc1 = fea * col_w(_TAP_OFFSETS[1] + 4 * 9 + 4)
    acc2 = fea * col_w(_TAP_OFFSETS[2] + 3 * 7 + 3)
    for oy in range(-_MAX_OFF, _MAX_OFF + 1):
        for ox in range(-_MAX_OFF, _MAX_OFF + 1):
            if oy == 0 and ox == 0:
                continue
            sh = shifted(fea, oy, ox)
            acc0 = acc0 + sh * col_w(_TAP_OFFSETS[0] + (oy + 5) * 11 + (ox + 5))
            if abs(oy) <= 4 and abs(ox) <= 4:
                acc1 = acc1 + sh * col_w(_TAP_OFFSETS[1] + (oy + 4) * 9 + (ox + 4))
            if abs(oy) <= 3 and abs(ox) <= 3:
                acc2 = acc2 + sh * col_w(_TAP_OFFSETS[2] + (oy + 3) * 7 + (ox + 3))
    mods = []
    for i, acc in enumerate((acc0, acc1, acc2)):
        _bias, g_c, b_c = _cp_cols(i)
        mods.append(bn(acc, g_c, b_c))

    # conv2[0](fea): 1x1 conv (+ bias, no BN so the bias matters).  Computed AFTER the
    # modulation loop so it is not live through the 121-offset unroll.
    out = mods[0] * (jnp.dot(pw_ref[1], fea, preferred_element_type=f32) + col_cp(3))

    # conv2[1]: 3x3 -> (3,1) -> (1,3) depthwise+BN chain.
    y = fea
    for layer in (3, 4, 5):
        y = dw_bn(y, layer)
    out = out + mods[1] * y

    # conv2[2]: 5x5 -> (5,1) -> (1,5) depthwise+BN chain.
    y = fea
    for layer in (6, 7, 8):
        y = dw_bn(y, layer)
    out = out + mods[2] * y

    # Residual (re-read from x_ref) + store back in (B, C, M) layout
    # (256-lane, multiple-of-128 -> unmasked stores).
    for b in range(B):
        o_ref[b] = (out[:, b * M:(b + 1) * M] + x_ref[b]).astype(o_ref.dtype)


# ----------------------------------------------------------------------------
# pltpu.roll direction probe (cached; run from the wrapper so callers cannot skip it)
# ----------------------------------------------------------------------------
@functools.lru_cache(maxsize=None)
def _resolve_roll_sign():
    """+1 if pltpu.roll follows jnp.roll's shift convention on this backend, else -1."""
    def k(x_ref, o_ref):
        o_ref[...] = pltpu.roll(x_ref[...], 3, axis=1)

    x = jnp.arange(8 * 128, dtype=jnp.float32).reshape(8, 128)
    y = pl.pallas_call(k, out_shape=jax.ShapeDtypeStruct((8, 128), jnp.float32),
                       in_specs=[_VMEM], out_specs=_VMEM)(x)
    if bool(jnp.array_equal(y, jnp.roll(x, 3, axis=1))):
        return 1
    if bool(jnp.array_equal(y, jnp.roll(x, -3, axis=1))):
        return -1
    raise AssertionError("unexpected pltpu.roll semantics")


# ----------------------------------------------------------------------------
# Public wrapper
# ----------------------------------------------------------------------------
def multi_modulation_forward(x_nchw, packed, *, roll_sign=None):
    """Forward pass.  x_nchw: (B, C, H, W) float32 (PyTorch layout)."""
    B, C, H, W = x_nchw.shape
    M = H * W
    if roll_sign is None:
        roll_sign = _resolve_roll_sign()           # cached hardware probe
    x = x_nchw.reshape(B, C, M)                    # pure reshape: spatial -> lane axis
    out = pl.pallas_call(
        functools.partial(_fused_kernel, B, C, H, W, roll_sign),
        out_shape=jax.ShapeDtypeStruct((B, C, M), jnp.float32),
        in_specs=[_VMEM] * 5,
        out_specs=_VMEM,
    )(x, packed["pw"], packed["dww"], packed["cp"], _mask_table(B, H, W))
    return out.reshape(B, C, H, W)


# ----------------------------------------------------------------------------
# Parameters: init (unpacked, reference-friendly) + packing for the kernel
# ----------------------------------------------------------------------------
def init_params(key, dim, scales=3):
    keys = iter(jax.random.split(key, 128))

    def nxt():
        return next(keys)

    def rand(shape, scale=0.1):
        return scale * jax.random.normal(nxt(), shape, jnp.float32)

    def bn():
        g = 1.0 + 0.1 * jax.random.normal(nxt(), (dim,), jnp.float32)
        b = 0.1 * jax.random.normal(nxt(), (dim,), jnp.float32)
        return g, b

    p = {}
    p["w_w"] = rand((dim, dim))          # self.w : Conv2d(dim, dim, 1) weight [Cout, Cin]
    p["w_b"] = rand((dim,))
    p["bn1_g"], p["bn1_b"] = bn()        # self.bn1

    # self.modulation[i]: depthwise k = 11 - 2i, pad 5 - i, + BN
    p["mod"] = []
    for i in range(scales):
        k = 11 - 2 * i
        p["mod"].append((rand((k, k, dim)), rand((dim,))) + bn())

    # self.conv2[0]: Conv2d(dim, dim, 1)
    p["c20_w"] = rand((dim, dim))
    p["c20_b"] = rand((dim,))

    # self.conv2[1], self.conv2[2]: chains of (k,k),(k,1),(1,k) depthwise + BN
    p["chain"] = []
    for k in (3, 5):
        chain = []
        for (kh, kw) in ((k, k), (k, 1), (1, k)):
            chain.append((rand((kh, kw, dim)), rand((dim,))) + bn())
        p["chain"].append(chain)
    return p


def _all_dw_layers(p):
    layers = list(p["mod"])
    for chain in p["chain"]:
        layers += list(chain)
    return layers


def pack_params(p):
    """Pack the module parameters into the 3 small matrices consumed by the kernel."""
    C = p["w_w"].shape[0]
    layers = _all_dw_layers(p)
    for (kh, kw), (w, _b, _g, _bt) in zip(_DW_LAYERS, layers):
        assert w.shape[:2] == (kh, kw), (w.shape, (kh, kw))

    pw = jnp.stack([p["w_w"], p["c20_w"]])                       # (2, C, C)

    dw_cols = [jnp.transpose(w, (2, 0, 1)).reshape(C, w.shape[0] * w.shape[1])
               for (w, _b, _g, _bt) in layers]
    dww = jnp.concatenate(dw_cols, axis=1)                       # (C, 301)
    assert dww.shape == (C, _NUM_TAPS)

    cp_cols = [p["w_b"], p["bn1_g"], p["bn1_b"], p["c20_b"]]
    for (_w, b, g, bt) in layers:
        cp_cols += [b, g, bt]
    cp = jnp.stack(cp_cols, axis=1)                              # (C, 31)
    return {"pw": pw, "dww": dww, "cp": cp}


# ----------------------------------------------------------------------------
# Pure-JAX reference (independent path, for correctness check)
# ----------------------------------------------------------------------------
def _bn_ref(y, g, b):
    mean = jnp.mean(y, axis=(0, 1, 2), keepdims=True)
    var = jnp.mean((y - mean) ** 2, axis=(0, 1, 2), keepdims=True)
    return g * (y - mean) * jax.lax.rsqrt(var + EPS) + b


def _dw_ref(x, w, b):
    kh, kw, C = w.shape
    y = jax.lax.conv_general_dilated(
        x, w.reshape(kh, kw, 1, C), window_strides=(1, 1),
        padding=(((kh - 1) // 2, (kh - 1) // 2), ((kw - 1) // 2, (kw - 1) // 2)),
        dimension_numbers=("NHWC", "HWIO", "NHWC"),
        feature_group_count=C)
    return y + b


def _pw_ref(x, w, b):
    return jnp.einsum("bhwi,oi->bhwo", x, w) + b


def forward_ref(x_nchw, p):
    x = jnp.transpose(x_nchw, (0, 2, 3, 1))
    fea = _bn_ref(_pw_ref(x, p["w_w"], p["w_b"]), p["bn1_g"], p["bn1_b"])
    mods = [_bn_ref(_dw_ref(fea, w, b), g, bt) for (w, b, g, bt) in p["mod"]]
    convs = [_pw_ref(fea, p["c20_w"], p["c20_b"])]
    for chain in p["chain"]:
        y = fea
        for (w, b, g, bt) in chain:
            y = _bn_ref(_dw_ref(y, w, b), g, bt)
        convs.append(y)
    out = mods[0] * convs[0] + mods[1] * convs[1] + mods[2] * convs[2] + x
    return jnp.transpose(out, (0, 3, 1, 2))


# ----------------------------------------------------------------------------
if __name__ == "__main__":
    key = jax.random.PRNGKey(0)
    kx, kp = jax.random.split(key)

    B, C, H, W = 2, 16, 16, 16                              # dim = 16
    x = jax.random.normal(kx, (B, C, H, W), jnp.float32)    # PyTorch NCHW input
    params = init_params(kp, C, scales=3)
    packed = pack_params(params)

    roll_sign = _resolve_roll_sign()
    fwd = jax.jit(functools.partial(multi_modulation_forward, roll_sign=roll_sign))

    out = jax.block_until_ready(fwd(x, packed))
    assert out.shape == (B, C, H, W) and out.dtype == jnp.float32

    ref = forward_ref(x, params)
    err = float(jnp.max(jnp.abs(out - ref)))
    if not math.isfinite(err) or err > 2e-3:
        raise AssertionError(f"mismatch vs JAX reference, max abs err = {err}")

    print("KERNEL_OK")
</pallas_src>

<mosaic_0001>
module attributes {stable_mosaic.version = 11 : i64} {
  func.func @k(%arg0: memref<8x128xf32, #tpu.memory_space<vmem>>, %arg1: memref<8x128xf32, #tpu.memory_space<vmem>>) attributes {dimension_semantics = [], scalar_prefetch = 0 : i64, scratch_operands = 0 : i64, tpu.core_type = #tpu.core_type<tc>} {
    %c0 = arith.constant 0 : index
    %c0_0 = arith.constant 0 : index
    %0 = vector.load %arg0[%c0, %c0_0] : memref<8x128xf32, #tpu.memory_space<vmem>>, vector<8x128xf32>
    %c3_i32 = arith.constant 3 : i32
    %1 = tpu.dynamic_rotate %0 by %c3_i32 dim 1 : vector<8x128xf32>, i32 -> vector<8x128xf32>
    %c0_1 = arith.constant 0 : index
    %c0_2 = arith.constant 0 : index
    %2 = vector.load %arg1[%c0_1, %c0_2] : memref<8x128xf32, #tpu.memory_space<vmem>>, vector<8x128xf32>
    tpu.vector_store %arg1[%c0_1, %c0_2], %1 {strides = array<i32>} : memref<8x128xf32, #tpu.memory_space<vmem>>, vector<8x128xf32>,
    return
  }
}

</mosaic_0001>

<llo_original>
// kernel: tpu_custom_call.1
$region0: #{tpu_custom_call.1}
  #allocation0 [shape = 'u32[]', space=smem, size = 0x4, offset = 0x4, fixed_abs, tag = 'smem constant byte address 0x4 - core index']
  #allocation1 [shape = 'u32[144,128]{1,0:T(1,128)}', space=vmem, size = 0x12000, scoped, tag = 'internal scratch']
  %s0 = inlined_call_operand.hbm [shape: f32[8,128], index: 0, kind: input, shape index: {}]
  %s1 = inlined_call_operand.hbm [shape: f32[8,128], index: 1, kind: output, shape index: {}]
  %s2 = sld [smem:[#allocation0]]
  $region18: #{tpu_custom_call.1} parent=0
    _
  %s4 = ssub.s32 1, %s2
  %s5 = scalar_select 0, %s4, %s2
  $region1: #{tpu_custom_call.1} parent=0
    #allocation2 [shape = 'u8[4096]{0}', space=vmem, size = 0x1000, scoped, tag = 'input window, operand 0, single buffered']
    #allocation3 [shape = 's32[1]{0}', space=sflag, size = 0x4, scoped, tag = 'scoped memory for tpu_custom_call.1']
    #allocation4 [shape = 's32[1]{0}', space=sflag, size = 0x4, scoped, tag = 'scoped memory for tpu_custom_call.1']
    #allocation5 [shape = 'u8[4096]{0}', space=vmem, size = 0x1000, scoped, tag = 'output window, operand 0, single buffered']
    %6 = vsyncpa [#allocation3], 0
    %7 = vsyncpa [#allocation4], 0
    // Predicated region
    $region2: #{tpu_custom_call.1} parent=1 // pred_check
      _
    $region3: #{tpu_custom_call.1} parent=1 // pred_check_branch
      %9 = sbr.rel (0) target = $region5
    $region4: #{tpu_custom_call.1} parent=1 // pred_region
      %s11 = ssub.s32 128, 128
      %12 = vsyncadd [#allocation3], %s11
      %s14 = sshll.u32 [#allocation2], 4
      %s15 = int_to_ptr.vmem [resolvable:$true] %s14
      %17 = dma.hbm_to_vmem [thread:$0]  %s0, 128, %s15, [#allocation3]
    $region5: #{tpu_custom_call.1} parent=1 // pred_fallthru
      _
    // Predicated region
    $region6: #{tpu_custom_call.1} parent=1 // pred_check
      _
    $region7: #{tpu_custom_call.1} parent=1 // pred_check_branch
      %19 = sbr.rel (0) target = $region9
    $region8: #{tpu_custom_call.1} parent=1 // pred_region
      %20 = dma.done [#allocation3], 128
    $region9: #{tpu_custom_call.1} parent=1 // pred_fallthru
      _
    %v21 = vld [vmem:[#allocation2] sm:$0xff]
    %22 = vrot.lane.b32.xlu0 %v21, 3
    %v23 = vpop.permute.xlu0 %22
    %24 = vst [vmem:[#allocation5] sm:$0xff] %v23
    // Predicated region
    $region10: #{tpu_custom_call.1} parent=1 // pred_check
      _
    $region11: #{tpu_custom_call.1} parent=1 // pred_check_branch
      %26 = sbr.rel (0) target = $region13
    $region12: #{tpu_custom_call.1} parent=1 // pred_region
      %s28 = ssub.s32 128, 128
      %29 = vsyncadd [#allocation4], %s28
      %s31 = sshll.u32 [#allocation5], 4
      %s32 = int_to_ptr.vmem [resolvable:$true] %s31
      %34 = dma.vmem_to_hbm [thread:$0]  %s32, 128, %s1, [#allocation4]
    $region13: #{tpu_custom_call.1} parent=1 // pred_fallthru
      _
    // Predicated region
    $region14: #{tpu_custom_call.1} parent=1 // pred_check
      _
    $region15: #{tpu_custom_call.1} parent=1 // pred_check_branch
      %36 = sbr.rel (0) target = $region17
    $region16: #{tpu_custom_call.1} parent=1 // pred_region
      %37 = dma.done [#allocation4], 128
    $region17: #{tpu_custom_call.1} parent=1 // pred_fallthru
      _
    %38 = vsyncpa [#allocation3], 1
    %39 = vsyncpa [#allocation4], 1

</llo_original>
